<compile_context>
chip_gen: v5e
topology: v5e:2x2
jax: 0.10.0
libtpu: 0.0.40
codegen_flags: <defaults>
</compile_context>

<pallas_src>
import jax
import jax.numpy as jnp
import numpy as np
from jax.experimental import pallas as pl
from jax.experimental.pallas import tpu as pltpu

_DOT_KW = dict(preferred_element_type=jnp.float32,
               precision=jax.lax.Precision.DEFAULT)


def _elman_kernel(x_ref, wxh_ref, bxh_ref, whh_ref, why_ref, bhy_ref, y_ref):
    """Whole forward in one invocation.  All shapes pre-padded by the wrapper.

    x_ref   : (T*Bp, D_in)   time-major input, flattened over (T, Bp), Bp = 8k
    wxh_ref : (D_in, Rp)     Rp = multiple of 128
    bxh_ref : (1, Rp)
    whh_ref : (Rp, Rp)
    why_ref : (Rp, O)
    bhy_ref : (1, O)
    y_ref   : (Bp, O)
    """
    Bp = y_ref.shape[0]
    T = x_ref.shape[0] // Bp
    Rp = whh_ref.shape[0]

    # Hoisted input projection for ALL timesteps: one MXU matmul, bias folded in.
    xproj = (jnp.dot(x_ref[...], wxh_ref[...], **_DOT_KW)
             + bxh_ref[...])                                   # (T*Bp, Rp) f32

    whh = whh_ref[...]                                         # stays in vregs

    # Serial recurrence, statically unrolled (T small).  Each per-t slice starts
    # at a multiple of Bp (a sublane-tile boundary), so it is a free view.
    h = jnp.zeros((Bp, Rp), dtype=jnp.float32)
    for t in range(T):
        h = jnp.maximum(
            xproj[t * Bp:(t + 1) * Bp, :]
            + jnp.dot(h, whh, **_DOT_KW),
            0.0)

    # Readout epilogue (single matmul + bias), off the critical path.
    y = jnp.dot(h, why_ref[...], **_DOT_KW) + bhy_ref[...]
    y_ref[...] = y.astype(y_ref.dtype)


def elman_forward(x, w_x2h, b_x2h, w_h2h, w_h2y, b_h2y):
    """Pallas Elman network forward.

    x      : (B, T, D_in)            — PyTorch batch-major input
    w_x2h  : (R, D_in)  b_x2h : (R,)    (nn.Linear weight layout: (out, in))
    w_h2h  : (R, R)                     (bias=False)
    w_h2y  : (O, R)     b_h2y : (O,)
    returns: (B, O)
    """
    B, T, D_in = x.shape
    R = w_x2h.shape[0]
    O = w_h2y.shape[0]

    # Pad batch to a full sublane tile and the recurrent dim to a full lane
    # width so every operand on the serial path is an exact (8,128) vreg tile.
    Bp = max(8, ((B + 7) // 8) * 8)
    Rp = max(128, ((R + 127) // 128) * 128)

    # Time-major, batch-padded, flattened input.
    x_tm = jnp.transpose(x, (1, 0, 2))                          # (T, B, D_in)
    x_tm = jnp.pad(x_tm, ((0, 0), (0, Bp - B), (0, 0)))         # (T, Bp, D_in)
    x_flat = x_tm.reshape(T * Bp, D_in)                         # (T*Bp, D_in)

    # (in, out) weight layouts, zero-padded on the recurrent dim; 2-D biases.
    wxh = jnp.pad(w_x2h.T, ((0, 0), (0, Rp - R)))               # (D_in, Rp)
    bxh = jnp.pad(b_x2h, (0, Rp - R)).reshape(1, Rp)            # (1, Rp)
    whh = jnp.pad(w_h2h.T, ((0, Rp - R), (0, Rp - R)))          # (Rp, Rp)
    why = jnp.pad(w_h2y.T, ((0, Rp - R), (0, 0)))               # (Rp, O)
    bhy = b_h2y.reshape(1, O)                                   # (1, O)

    vmem_spec = lambda: pl.BlockSpec(memory_space=pltpu.MemorySpace.VMEM)

    y_pad = pl.pallas_call(
        _elman_kernel,
        out_shape=jax.ShapeDtypeStruct((Bp, O), x.dtype),
        in_specs=[vmem_spec() for _ in range(6)],
        out_specs=vmem_spec(),
    )(x_flat, wxh, bxh, whh, why, bhy)

    return y_pad[:B]


def elman_reference(x, w_x2h, b_x2h, w_h2h, w_h2y, b_h2y):
    """Pure-JAX reference mirroring the PyTorch forward."""
    B, T, _ = x.shape
    R = w_x2h.shape[0]
    h = jnp.zeros((B, R), dtype=jnp.float32)
    for t in range(T):
        h = jax.nn.relu(x[:, t].astype(jnp.float32) @ w_x2h.T + b_x2h
                        + h @ w_h2h.T)
    return (h @ w_h2y.T + b_h2y).astype(x.dtype)


if __name__ == "__main__":
    # Small shapes implied by the module: batch=2, seq=8, input=16, hidden=32, out=8.
    B, T, D_IN, R, O = 2, 8, 16, 32, 8

    key = jax.random.PRNGKey(0)
    k = jax.random.split(key, 6)
    x = jax.random.normal(k[0], (B, T, D_IN), dtype=jnp.float32)
    # Deterministic parameter init (PyTorch nn.Linear weight layout: (out, in)).
    w_x2h = jax.random.normal(k[1], (R, D_IN), dtype=jnp.float32) * 0.1
    b_x2h = jax.random.normal(k[2], (R,), dtype=jnp.float32) * 0.1
    w_h2h = jax.random.normal(k[3], (R, R), dtype=jnp.float32) * 0.1
    w_h2y = jax.random.normal(k[4], (O, R), dtype=jnp.float32) * 0.1
    b_h2y = jax.random.normal(k[5], (O,), dtype=jnp.float32) * 0.1

    y = elman_forward(x, w_x2h, b_x2h, w_h2h, w_h2y, b_h2y)
    y = jax.block_until_ready(y)

    y_ref = elman_reference(x, w_x2h, b_x2h, w_h2h, w_h2y, b_h2y)
    np.testing.assert_allclose(np.asarray(y), np.asarray(y_ref),
                               rtol=1e-5, atol=1e-5)
    print("KERNEL_OK")
</pallas_src>

<mosaic_0001>
module attributes {stable_mosaic.version = 11 : i64} {
  func.func @_elman_kernel(%arg0: memref<64x16xf32, #tpu.memory_space<vmem>>, %arg1: memref<16x128xf32, #tpu.memory_space<vmem>>, %arg2: memref<1x128xf32, #tpu.memory_space<vmem>>, %arg3: memref<128x128xf32, #tpu.memory_space<vmem>>, %arg4: memref<128x8xf32, #tpu.memory_space<vmem>>, %arg5: memref<1x8xf32, #tpu.memory_space<vmem>>, %arg6: memref<8x8xf32, #tpu.memory_space<vmem>>) attributes {dimension_semantics = [], scalar_prefetch = 0 : i64, scratch_operands = 0 : i64, tpu.core_type = #tpu.core_type<tc>} {
    %c0 = arith.constant 0 : index
    %c0_0 = arith.constant 0 : index
    %0 = vector.load %arg0[%c0, %c0_0] : memref<64x16xf32, #tpu.memory_space<vmem>>, vector<64x16xf32>
    %c0_1 = arith.constant 0 : index
    %c0_2 = arith.constant 0 : index
    %1 = vector.load %arg1[%c0_1, %c0_2] : memref<16x128xf32, #tpu.memory_space<vmem>>, vector<16x128xf32>
    %cst = arith.constant dense<0.000000e+00> : vector<64x128xf32>
    %2 = tpu.matmul %0, %1, %cst {dimension_numbers = #tpu.dot_dimension_numbers<[1], [0], [0], [1], [0, 0, 1, 1], [], []>} : vector<64x16xf32>, vector<16x128xf32>, vector<64x128xf32> -> vector<64x128xf32>
    %c0_3 = arith.constant 0 : index
    %c0_4 = arith.constant 0 : index
    %3 = vector.load %arg2[%c0_3, %c0_4] : memref<1x128xf32, #tpu.memory_space<vmem>>, vector<1x128xf32>
    %4 = vector.broadcast %3 : vector<1x128xf32> to vector<64x128xf32>
    %5 = arith.addf %2, %4 : vector<64x128xf32>
    %c0_5 = arith.constant 0 : index
    %c0_6 = arith.constant 0 : index
    %6 = vector.load %arg3[%c0_5, %c0_6] : memref<128x128xf32, #tpu.memory_space<vmem>>, vector<128x128xf32>
    %cst_7 = arith.constant 0.000000e+00 : f32
    %7 = vector.broadcast %cst_7 : f32 to vector<8x128xf32>
    %8 = vector.extract_strided_slice %5 {offsets = [0, 0], sizes = [8, 128], strides = [1, 1]} : vector<64x128xf32> to vector<8x128xf32>
    %cst_8 = arith.constant dense<0.000000e+00> : vector<8x128xf32>
    %9 = tpu.matmul %7, %6, %cst_8 {dimension_numbers = #tpu.dot_dimension_numbers<[1], [0], [0], [1], [0, 0, 1, 1], [], []>} : vector<8x128xf32>, vector<128x128xf32>, vector<8x128xf32> -> vector<8x128xf32>
    %10 = arith.addf %8, %9 : vector<8x128xf32>
    %cst_9 = arith.constant 0.000000e+00 : f32
    %11 = vector.broadcast %cst_9 : f32 to vector<8x128xf32>
    %12 = arith.maximumf %10, %11 : vector<8x128xf32>
    %13 = vector.extract_strided_slice %5 {offsets = [8, 0], sizes = [8, 128], strides = [1, 1]} : vector<64x128xf32> to vector<8x128xf32>
    %cst_10 = arith.constant dense<0.000000e+00> : vector<8x128xf32>
    %14 = tpu.matmul %12, %6, %cst_10 {dimension_numbers = #tpu.dot_dimension_numbers<[1], [0], [0], [1], [0, 0, 1, 1], [], []>} : vector<8x128xf32>, vector<128x128xf32>, vector<8x128xf32> -> vector<8x128xf32>
    %15 = arith.addf %13, %14 : vector<8x128xf32>
    %cst_11 = arith.constant 0.000000e+00 : f32
    %16 = vector.broadcast %cst_11 : f32 to vector<8x128xf32>
    %17 = arith.maximumf %15, %16 : vector<8x128xf32>
    %18 = vector.extract_strided_slice %5 {offsets = [16, 0], sizes = [8, 128], strides = [1, 1]} : vector<64x128xf32> to vector<8x128xf32>
    %cst_12 = arith.constant dense<0.000000e+00> : vector<8x128xf32>
    %19 = tpu.matmul %17, %6, %cst_12 {dimension_numbers = #tpu.dot_dimension_numbers<[1], [0], [0], [1], [0, 0, 1, 1], [], []>} : vector<8x128xf32>, vector<128x128xf32>, vector<8x128xf32> -> vector<8x128xf32>
    %20 = arith.addf %18, %19 : vector<8x128xf32>
    %cst_13 = arith.constant 0.000000e+00 : f32
    %21 = vector.broadcast %cst_13 : f32 to vector<8x128xf32>
    %22 = arith.maximumf %20, %21 : vector<8x128xf32>
    %23 = vector.extract_strided_slice %5 {offsets = [24, 0], sizes = [8, 128], strides = [1, 1]} : vector<64x128xf32> to vector<8x128xf32>
    %cst_14 = arith.constant dense<0.000000e+00> : vector<8x128xf32>
    %24 = tpu.matmul %22, %6, %cst_14 {dimension_numbers = #tpu.dot_dimension_numbers<[1], [0], [0], [1], [0, 0, 1, 1], [], []>} : vector<8x128xf32>, vector<128x128xf32>, vector<8x128xf32> -> vector<8x128xf32>
    %25 = arith.addf %23, %24 : vector<8x128xf32>
    %cst_15 = arith.constant 0.000000e+00 : f32
    %26 = vector.broadcast %cst_15 : f32 to vector<8x128xf32>
    %27 = arith.maximumf %25, %26 : vector<8x128xf32>
    %28 = vector.extract_strided_slice %5 {offsets = [32, 0], sizes = [8, 128], strides = [1, 1]} : vector<64x128xf32> to vector<8x128xf32>
    %cst_16 = arith.constant dense<0.000000e+00> : vector<8x128xf32>
    %29 = tpu.matmul %27, %6, %cst_16 {dimension_numbers = #tpu.dot_dimension_numbers<[1], [0], [0], [1], [0, 0, 1, 1], [], []>} : vector<8x128xf32>, vector<128x128xf32>, vector<8x128xf32> -> vector<8x128xf32>
    %30 = arith.addf %28, %29 : vector<8x128xf32>
    %cst_17 = arith.constant 0.000000e+00 : f32
    %31 = vector.broadcast %cst_17 : f32 to vector<8x128xf32>
    %32 = arith.maximumf %30, %31 : vector<8x128xf32>
    %33 = vector.extract_strided_slice %5 {offsets = [40, 0], sizes = [8, 128], strides = [1, 1]} : vector<64x128xf32> to vector<8x128xf32>
    %cst_18 = arith.constant dense<0.000000e+00> : vector<8x128xf32>
    %34 = tpu.matmul %32, %6, %cst_18 {dimension_numbers = #tpu.dot_dimension_numbers<[1], [0], [0], [1], [0, 0, 1, 1], [], []>} : vector<8x128xf32>, vector<128x128xf32>, vector<8x128xf32> -> vector<8x128xf32>
    %35 = arith.addf %33, %34 : vector<8x128xf32>
    %cst_19 = arith.constant 0.000000e+00 : f32
    %36 = vector.broadcast %cst_19 : f32 to vector<8x128xf32>
    %37 = arith.maximumf %35, %36 : vector<8x128xf32>
    %38 = vector.extract_strided_slice %5 {offsets = [48, 0], sizes = [8, 128], strides = [1, 1]} : vector<64x128xf32> to vector<8x128xf32>
    %cst_20 = arith.constant dense<0.000000e+00> : vector<8x128xf32>
    %39 = tpu.matmul %37, %6, %cst_20 {dimension_numbers = #tpu.dot_dimension_numbers<[1], [0], [0], [1], [0, 0, 1, 1], [], []>} : vector<8x128xf32>, vector<128x128xf32>, vector<8x128xf32> -> vector<8x128xf32>
    %40 = arith.addf %38, %39 : vector<8x128xf32>
    %cst_21 = arith.constant 0.000000e+00 : f32
    %41 = vector.broadcast %cst_21 : f32 to vector<8x128xf32>
    %42 = arith.maximumf %40, %41 : vector<8x128xf32>
    %43 = vector.extract_strided_slice %5 {offsets = [56, 0], sizes = [8, 128], strides = [1, 1]} : vector<64x128xf32> to vector<8x128xf32>
    %cst_22 = arith.constant dense<0.000000e+00> : vector<8x128xf32>
    %44 = tpu.matmul %42, %6, %cst_22 {dimension_numbers = #tpu.dot_dimension_numbers<[1], [0], [0], [1], [0, 0, 1, 1], [], []>} : vector<8x128xf32>, vector<128x128xf32>, vector<8x128xf32> -> vector<8x128xf32>
    %45 = arith.addf %43, %44 : vector<8x128xf32>
    %cst_23 = arith.constant 0.000000e+00 : f32
    %46 = vector.broadcast %cst_23 : f32 to vector<8x128xf32>
    %47 = arith.maximumf %45, %46 : vector<8x128xf32>
    %c0_24 = arith.constant 0 : index
    %c0_25 = arith.constant 0 : index
    %48 = vector.load %arg4[%c0_24, %c0_25] : memref<128x8xf32, #tpu.memory_space<vmem>>, vector<128x8xf32>
    %cst_26 = arith.constant dense<0.000000e+00> : vector<8x8xf32>
    %49 = tpu.matmul %47, %48, %cst_26 {dimension_numbers = #tpu.dot_dimension_numbers<[1], [0], [0], [1], [0, 0, 1, 1], [], []>} : vector<8x128xf32>, vector<128x8xf32>, vector<8x8xf32> -> vector<8x8xf32>
    %c0_27 = arith.constant 0 : index
    %c0_28 = arith.constant 0 : index
    %50 = vector.load %arg5[%c0_27, %c0_28] : memref<1x8xf32, #tpu.memory_space<vmem>>, vector<1x8xf32>
    %51 = vector.broadcast %50 : vector<1x8xf32> to vector<8x8xf32>
    %52 = arith.addf %49, %51 : vector<8x8xf32>
    %c0_29 = arith.constant 0 : index
    %c0_30 = arith.constant 0 : index
    %53 = vector.load %arg6[%c0_29, %c0_30] : memref<8x8xf32, #tpu.memory_space<vmem>>, vector<8x8xf32>
    tpu.vector_store %arg6[%c0_29, %c0_30], %52 {strides = array<i32>} : memref<8x8xf32, #tpu.memory_space<vmem>>, vector<8x8xf32>,
    return
  }
}

</mosaic_0001>

<llo_original>
// kernel: tpu_custom_call.1
$region0: #{tpu_custom_call.1}
  #allocation0 [shape = 'u32[]', space=smem, size = 0x4, offset = 0x4, fixed_abs, tag = 'smem constant byte address 0x4 - core index']
  #allocation1 [shape = 'u32[72,128]{1,0:T(1,128)}', space=vmem, size = 0x9000, scoped, tag = 'internal scratch']
  %s0 = inlined_call_operand.vmem [shape: f32[64,16], index: 0, kind: input, shape index: {}]
  %s1 = inlined_call_operand.vmem [shape: f32[16,128], index: 1, kind: input, shape index: {}]
  %s2 = inlined_call_operand.vmem [shape: f32[1,128], index: 2, kind: input, shape index: {}]
  %s3 = inlined_call_operand.vmem [shape: f32[128,128], index: 3, kind: input, shape index: {}]
  %s4 = inlined_call_operand.vmem [shape: f32[128,8], index: 4, kind: input, shape index: {}]
  %s5 = inlined_call_operand.vmem [shape: f32[1,8], index: 5, kind: input, shape index: {}]
  %s6 = inlined_call_operand.hbm [shape: f32[8,8], index: 6, kind: output, shape index: {}]
  %s7 = sld [smem:[#allocation0]]
  $region34: #{tpu_custom_call.1} parent=0
    _
  %s9 = ssub.s32 1, %s7
  %s10 = scalar_select 0, %s9, %s7
  $region1: #{tpu_custom_call.1} parent=0
    #allocation2 [shape = 'u8[4096]{0}', space=vmem, size = 0x1000, scoped, tag = 'output window, operand 0, single buffered']
    #allocation3 [shape = 's32[1]{0}', space=sflag, size = 0x4, scoped, tag = 'scoped memory for tpu_custom_call.1']
    %11 = vsyncpa [#allocation3], 0
    // Predicated region
    $region2: #{tpu_custom_call.1} parent=1 // pred_check
      _
    $region3: #{tpu_custom_call.1} parent=1 // pred_check_branch
      %13 = sbr.rel (0) target = $region5
    $region4: #{tpu_custom_call.1} parent=1 // pred_region
      _
    $region5: #{tpu_custom_call.1} parent=1 // pred_fallthru
      _
    // Predicated region
    $region6: #{tpu_custom_call.1} parent=1 // pred_check
      _
    $region7: #{tpu_custom_call.1} parent=1 // pred_check_branch
      %15 = sbr.rel (0) target = $region9
    $region8: #{tpu_custom_call.1} parent=1 // pred_region
      _
    $region9: #{tpu_custom_call.1} parent=1 // pred_fallthru
      _
    // Predicated region
    $region10: #{tpu_custom_call.1} parent=1 // pred_check
      _
    $region11: #{tpu_custom_call.1} parent=1 // pred_check_branch
      %17 = sbr.rel (0) target = $region13
    $region12: #{tpu_custom_call.1} parent=1 // pred_region
      _
    $region13: #{tpu_custom_call.1} parent=1 // pred_fallthru
      _
    // Predicated region
    $region14: #{tpu_custom_call.1} parent=1 // pred_check
      _
    $region15: #{tpu_custom_call.1} parent=1 // pred_check_branch
      %19 = sbr.rel (0) target = $region17
    $region16: #{tpu_custom_call.1} parent=1 // pred_region
      _
    $region17: #{tpu_custom_call.1} parent=1 // pred_fallthru
      _
    // Predicated region
    $region18: #{tpu_custom_call.1} parent=1 // pred_check
      _
    $region19: #{tpu_custom_call.1} parent=1 // pred_check_branch
      %21 = sbr.rel (0) target = $region21
    $region20: #{tpu_custom_call.1} parent=1 // pred_region
      _
    $region21: #{tpu_custom_call.1} parent=1 // pred_fallthru
      _
    // Predicated region
    $region22: #{tpu_custom_call.1} parent=1 // pred_check
      _
    $region23: #{tpu_custom_call.1} parent=1 // pred_check_branch
      %23 = sbr.rel (0) target = $region25
    $region24: #{tpu_custom_call.1} parent=1 // pred_region
      _
    $region25: #{tpu_custom_call.1} parent=1 // pred_fallthru
      _
    %v24 = vld [vmem:[%s0] sm:$0xff]
    %v25 = vld [vmem:[%s0 + $0x8] sm:$0xff]
    %v26 = vld [vmem:[%s0 + $0x10] sm:$0xff]
    %v27 = vld [vmem:[%s0 + $0x18] sm:$0xff]
    %v28 = vld [vmem:[%s0 + $0x20] sm:$0xff]
    %v29 = vld [vmem:[%s0 + $0x28] sm:$0xff]
    %v30 = vld [vmem:[%s0 + $0x30] sm:$0xff]
    %v31 = vld [vmem:[%s0 + $0x38] sm:$0xff]
    %v32 = vld [vmem:[%s1] sm:$0xff]
    %v33 = vld [vmem:[%s1 + $0x8] sm:$0xff]
    %v34 = vld [vmem:[%s2] sm:$0x1]
    %v36 = vperm.slane %v34, 0
    %vm38 = vcmask 130048
    %v40 = vsel %vm38, %v24, 0
    %v43 = vsel %vm38, %v25, 0
    %v46 = vsel %vm38, %v26, 0
    %v49 = vsel %vm38, %v27, 0
    %v52 = vsel %vm38, %v28, 0
    %v55 = vsel %vm38, %v29, 0
    %v58 = vsel %vm38, %v30, 0
    %v61 = vsel %vm38, %v31, 0
    %63 = vmatpush.msra.mxu0 0.0
    %64 = vmatpush.msra.mxu0 0.0
    %65 = vmatpush.msra.mxu0 0.0
    %66 = vmatpush.msra.mxu0 0.0
    %67 = vmatpush.msra.mxu0 0.0
    %68 = vmatpush.msra.mxu0 0.0
    %69 = vmatpush.msra.mxu0 0.0
    %70 = vmatpush.msra.mxu0 0.0
    %71 = vmatpush.msra.mxu0 0.0
    %72 = vmatpush.msra.mxu0 0.0
    %73 = vmatpush.msra.mxu0 0.0
    %74 = vmatpush.msra.mxu0 0.0
    %75 = vmatpush.msra.mxu0 0.0
    %76 = vmatpush.msra.mxu0 0.0
    %77 = vmatpush.msra.mxu0 %v33
    %78 = vmatpush.msra.mxu0 %v32
    %79 = vmatmul.f32.gmra.mxu0 %v40
    %v80 = vpop.f32.mrf.mxu0
    %v81 = vadd.f32 %v36, %v80
    %82 = vmatmul.f32.gmra.mxu0 %v43
    %v83 = vpop.f32.mrf.mxu0
    %v84 = vadd.f32 %v36, %v83
    %85 = vmatmul.f32.gmra.mxu0 %v46
    %v86 = vpop.f32.mrf.mxu0
    %v87 = vadd.f32 %v36, %v86
    %88 = vmatmul.f32.gmra.mxu0 %v49
    %v89 = vpop.f32.mrf.mxu0
    %v90 = vadd.f32 %v36, %v89
    %91 = vmatmul.f32.gmra.mxu0 %v52
    %v92 = vpop.f32.mrf.mxu0
    %v93 = vadd.f32 %v36, %v92
    %94 = vmatmul.f32.gmra.mxu0 %v55
    %v95 = vpop.f32.mrf.mxu0
    %v96 = vadd.f32 %v36, %v95
    %97 = vmatmul.f32.gmra.mxu0 %v58
    %v98 = vpop.f32.mrf.mxu0
    %v99 = vadd.f32 %v36, %v98
    %100 = vmatmul.f32.gmra.mxu0 %v61
    %v101 = vpop.f32.mrf.mxu0
    %v102 = vadd.f32 %v36, %v101
    %103 = vdwg.mxu0
    %v104 = vld [vmem:[%s3] sm:$0xff]
    %v105 = vld [vmem:[%s3 + $0x8] sm:$0xff]
    %v106 = vld [vmem:[%s3 + $0x10] sm:$0xff]
    %v107 = vld [vmem:[%s3 + $0x18] sm:$0xff]
    %v108 = vld [vmem:[%s3 + $0x20] sm:$0xff]
    %v109 = vld [vmem:[%s3 + $0x28] sm:$0xff]
    %v110 = vld [vmem:[%s3 + $0x30] sm:$0xff]
    %v111 = vld [vmem:[%s3 + $0x38] sm:$0xff]
    %v112 = vld [vmem:[%s3 + $0x40] sm:$0xff]
    %v113 = vld [vmem:[%s3 + $0x48] sm:$0xff]
    %v114 = vld [vmem:[%s3 + $0x50] sm:$0xff]
    %v115 = vld [vmem:[%s3 + $0x58] sm:$0xff]
    %v116 = vld [vmem:[%s3 + $0x60] sm:$0xff]
    %v117 = vld [vmem:[%s3 + $0x68] sm:$0xff]
    %v118 = vld [vmem:[%s3 + $0x70] sm:$0xff]
    %v119 = vld [vmem:[%s3 + $0x78] sm:$0xff]
    %120 = vmatpush.msra.mxu0 %v119
    %121 = vmatpush.msra.mxu0 %v118
    %122 = vmatpush.msra.mxu0 %v117
    %123 = vmatpush.msra.mxu0 %v116
    %124 = vmatpush.msra.mxu0 %v115
    %125 = vmatpush.msra.mxu0 %v114
    %126 = vmatpush.msra.mxu0 %v113
    %127 = vmatpush.msra.mxu0 %v112
    %128 = vmatpush.msra.mxu0 %v111
    %129 = vmatpush.msra.mxu0 %v110
    %130 = vmatpush.msra.mxu0 %v109
    %131 = vmatpush.msra.mxu0 %v108
    %132 = vmatpush.msra.mxu0 %v107
    %133 = vmatpush.msra.mxu0 %v106
    %134 = vmatpush.msra.mxu0 %v105
    %135 = vmatpush.msra.mxu0 %v104
    %136 = vmatmul.f32.gmra.mxu0 0.0
    %v137 = vpop.f32.mrf.mxu0
    %v138 = vadd.f32 0.0, %v137
    %139 = vdwg.mxu0
    %v140 = vadd.f32 %v81, %v138
    %v141 = vmax.f32 %v140, 0.0
    %142 = vmatpush.msra.mxu0 %v119
    %143 = vmatpush.msra.mxu0 %v118
    %144 = vmatpush.msra.mxu0 %v117
    %145 = vmatpush.msra.mxu0 %v116
    %146 = vmatpush.msra.mxu0 %v115
    %147 = vmatpush.msra.mxu0 %v114
    %148 = vmatpush.msra.mxu0 %v113
    %149 = vmatpush.msra.mxu0 %v112
    %150 = vmatpush.msra.mxu0 %v111
    %151 = vmatpush.msra.mxu0 %v110
    %152 = vmatpush.msra.mxu0 %v109
    %153 = vmatpush.msra.mxu0 %v108
    %154 = vmatpush.msra.mxu0 %v107
    %155 = vmatpush.msra.mxu0 %v106
    %156 = vmatpush.msra.mxu0 %v105
    %157 = vmatpush.msra.mxu0 %v104
    %158 = vmatmul.f32.gmra.mxu0 %v141
    %v159 = vpop.f32.mrf.mxu0
    %v160 = vadd.f32 0.0, %v159
    %161 = vdwg.mxu0
    %v162 = vadd.f32 %v84, %v160
    %v163 = vmax.f32 %v162, 0.0
    %164 = vmatpush.msra.mxu0 %v119
    %165 = vmatpush.msra.mxu0 %v118
    %166 = vmatpush.msra.mxu0 %v117
    %167 = vmatpush.msra.mxu0 %v116
    %168 = vmatpush.msra.mxu0 %v115
    %169 = vmatpush.msra.mxu0 %v114
    %170 = vmatpush.msra.mxu0 %v113
    %171 = vmatpush.msra.mxu0 %v112
    %172 = vmatpush.msra.mxu0 %v111
    %173 = vmatpush.msra.mxu0 %v110
    %174 = vmatpush.msra.mxu0 %v109
    %175 = vmatpush.msra.mxu0 %v108
    %176 = vmatpush.msra.mxu0 %v107
    %177 = vmatpush.msra.mxu0 %v106
    %178 = vmatpush.msra.mxu0 %v105
    %179 = vmatpush.msra.mxu0 %v104
    %180 = vmatmul.f32.gmra.mxu0 %v163
    %v181 = vpop.f32.mrf.mxu0
    %v182 = vadd.f32 0.0, %v181
    %183 = vdwg.mxu0
    %v184 = vadd.f32 %v87, %v182
    %v185 = vmax.f32 %v184, 0.0
    %186 = vmatpush.msra.mxu0 %v119
    %187 = vmatpush.msra.mxu0 %v118
    %188 = vmatpush.msra.mxu0 %v117
    %189 = vmatpush.msra.mxu0 %v116
    %190 = vmatpush.msra.mxu0 %v115
    %191 = vmatpush.msra.mxu0 %v114
    %192 = vmatpush.msra.mxu0 %v113
    %193 = vmatpush.msra.mxu0 %v112
    %194 = vmatpush.msra.mxu0 %v111
    %195 = vmatpush.msra.mxu0 %v110
    %196 = vmatpush.msra.mxu0 %v109
    %197 = vmatpush.msra.mxu0 %v108
    %198 = vmatpush.msra.mxu0 %v107
    %199 = vmatpush.msra.mxu0 %v106
    %200 = vmatpush.msra.mxu0 %v105
    %201 = vmatpush.msra.mxu0 %v104
    %202 = vmatmul.f32.gmra.mxu0 %v185
    %v203 = vpop.f32.mrf.mxu0
    %v204 = vadd.f32 0.0, %v203
    %205 = vdwg.mxu0
    %v206 = vadd.f32 %v90, %v204
    %v207 = vmax.f32 %v206, 0.0
    %208 = vmatpush.msra.mxu0 %v119
    %209 = vmatpush.msra.mxu0 %v118
    %210 = vmatpush.msra.mxu0 %v117
    %211 = vmatpush.msra.mxu0 %v116
    %212 = vmatpush.msra.mxu0 %v115
    %213 = vmatpush.msra.mxu0 %v114
    %214 = vmatpush.msra.mxu0 %v113
    %215 = vmatpush.msra.mxu0 %v112
    %216 = vmatpush.msra.mxu0 %v111
    %217 = vmatpush.msra.mxu0 %v110
    %218 = vmatpush.msra.mxu0 %v109
    %219 = vmatpush.msra.mxu0 %v108
    %220 = vmatpush.msra.mxu0 %v107
    %221 = vmatpush.msra.mxu0 %v106
    %222 = vmatpush.msra.mxu0 %v105
    %223 = vmatpush.msra.mxu0 %v104
    %224 = vmatmul.f32.gmra.mxu0 %v207
    %v225 = vpop.f32.mrf.mxu0
    %v226 = vadd.f32 0.0, %v225
    %227 = vdwg.mxu0
    %v228 = vadd.f32 %v93, %v226
    %v229 = vmax.f32 %v228, 0.0
    %230 = vmatpush.msra.mxu0 %v119
    %231 = vmatpush.msra.mxu0 %v118
    %232 = vmatpush.msra.mxu0 %v117
    %233 = vmatpush.msra.mxu0 %v116
    %234 = vmatpush.msra.mxu0 %v115
    %235 = vmatpush.msra.mxu0 %v114
    %236 = vmatpush.msra.mxu0 %v113
    %237 = vmatpush.msra.mxu0 %v112
    %238 = vmatpush.msra.mxu0 %v111
    %239 = vmatpush.msra.mxu0 %v110
    %240 = vmatpush.msra.mxu0 %v109
    %241 = vmatpush.msra.mxu0 %v108
    %242 = vmatpush.msra.mxu0 %v107
    %243 = vmatpush.msra.mxu0 %v106
    %244 = vmatpush.msra.mxu0 %v105
    %245 = vmatpush.msra.mxu0 %v104
    %246 = vmatmul.f32.gmra.mxu0 %v229
    %v247 = vpop.f32.mrf.mxu0
    %v248 = vadd.f32 0.0, %v247
    %249 = vdwg.mxu0
    %v250 = vadd.f32 %v96, %v248
    %v251 = vmax.f32 %v250, 0.0
    %252 = vmatpush.msra.mxu0 %v119
    %253 = vmatpush.msra.mxu0 %v118
    %254 = vmatpush.msra.mxu0 %v117
    %255 = vmatpush.msra.mxu0 %v116
    %256 = vmatpush.msra.mxu0 %v115
    %257 = vmatpush.msra.mxu0 %v114
    %258 = vmatpush.msra.mxu0 %v113
    %259 = vmatpush.msra.mxu0 %v112
    %260 = vmatpush.msra.mxu0 %v111
    %261 = vmatpush.msra.mxu0 %v110
    %262 = vmatpush.msra.mxu0 %v109
    %263 = vmatpush.msra.mxu0 %v108
    %264 = vmatpush.msra.mxu0 %v107
    %265 = vmatpush.msra.mxu0 %v106
    %266 = vmatpush.msra.mxu0 %v105
    %267 = vmatpush.msra.mxu0 %v104
    %268 = vmatmul.f32.gmra.mxu0 %v251
    %v269 = vpop.f32.mrf.mxu0
    %v270 = vadd.f32 0.0, %v269
    %271 = vdwg.mxu0
    %v272 = vadd.f32 %v99, %v270
    %v273 = vmax.f32 %v272, 0.0
    %274 = vmatpush.msra.mxu0 %v119
    %275 = vmatpush.msra.mxu0 %v118
    %276 = vmatpush.msra.mxu0 %v117
    %277 = vmatpush.msra.mxu0 %v116
    %278 = vmatpush.msra.mxu0 %v115
    %279 = vmatpush.msra.mxu0 %v114
    %280 = vmatpush.msra.mxu0 %v113
    %281 = vmatpush.msra.mxu0 %v112
    %282 = vmatpush.msra.mxu0 %v111
    %283 = vmatpush.msra.mxu0 %v110
    %284 = vmatpush.msra.mxu0 %v109
    %285 = vmatpush.msra.mxu0 %v108
    %286 = vmatpush.msra.mxu0 %v107
    %287 = vmatpush.msra.mxu0 %v106
    %288 = vmatpush.msra.mxu0 %v105
    %289 = vmatpush.msra.mxu0 %v104
    %290 = vmatmul.f32.gmra.mxu0 %v273
    %v291 = vpop.f32.mrf.mxu0
    %v292 = vadd.f32 0.0, %v291
    %293 = vdwg.mxu0
    %v294 = vadd.f32 %v102, %v292
    %v295 = vmax.f32 %v294, 0.0
    %v296 = vld [vmem:[%s4] sm:$0xff]
    %v297 = vld [vmem:[%s4 + $0x8] sm:$0xff]
    %v298 = vld [vmem:[%s4 + $0x10] sm:$0xff]
    %v299 = vld [vmem:[%s4 + $0x18] sm:$0xff]
    %v300 = vld [vmem:[%s4 + $0x20] sm:$0xff]
    %v301 = vld [vmem:[%s4 + $0x28] sm:$0xff]
    %v302 = vld [vmem:[%s4 + $0x30] sm:$0xff]
    %v303 = vld [vmem:[%s4 + $0x38] sm:$0xff]
    %v304 = vld [vmem:[%s4 + $0x40] sm:$0xff]
    %v305 = vld [vmem:[%s4 + $0x48] sm:$0xff]
    %v306 = vld [vmem:[%s4 + $0x50] sm:$0xff]
    %v307 = vld [vmem:[%s4 + $0x58] sm:$0xff]
    %v308 = vld [vmem:[%s4 + $0x60] sm:$0xff]
    %v309 = vld [vmem:[%s4 + $0x68] sm:$0xff]
    %v310 = vld [vmem:[%s4 + $0x70] sm:$0xff]
    %v311 = vld [vmem:[%s4 + $0x78] sm:$0xff]
    %v312 = vld [vmem:[%s5] sm:$0x1]
    %v314 = vperm.slane %v312, 0
    %316 = vmatpush.msra.mxu0 %v311
    %317 = vmatpush.msra.mxu0 %v310
    %318 = vmatpush.msra.mxu0 %v309
    %319 = vmatpush.msra.mxu0 %v308
    %320 = vmatpush.msra.mxu0 %v307
    %321 = vmatpush.msra.mxu0 %v306
    %322 = vmatpush.msra.mxu0 %v305
    %323 = vmatpush.msra.mxu0 %v304
    %324 = vmatpush.msra.mxu0 %v303
    %325 = vmatpush.msra.mxu0 %v302
    %326 = vmatpush.msra.mxu0 %v301
    %327 = vmatpush.msra.mxu0 %v300
    %328 = vmatpush.msra.mxu0 %v299
    %329 = vmatpush.msra.mxu0 %v298
    %330 = vmatpush.msra.mxu0 %v297
    %331 = vmatpush.msra.mxu0 %v296
    %332 = vmatmul.f32.gmra.mxu0 %v295
    %v333 = vpop.f32.mrf.mxu0
    %v334 = vadd.f32 %v314, %v333
    %335 = vdwg.mxu0
    %vm336 = vcmask 64512
    %337 = vst.msk [vmem:[#allocation2] sm:$0xff] %vm336, %v334
    // Predicated region
    $region26: #{tpu_custom_call.1} parent=1 // pred_check
      _
    $region27: #{tpu_custom_call.1} parent=1 // pred_check_branch
      %339 = sbr.rel (0) target = $region29
    $region28: #{tpu_custom_call.1} parent=1 // pred_region
      %341 = vsyncadd [#allocation3], 0
      %s343 = sshll.u32 [#allocation2], 4
      %s344 = int_to_ptr.vmem [resolvable:$true] %s343
      %s345 = sshll.u32 %s6, 4
      %s346 = int_to_ptr.hbm [resolvable:$true] %s345
      %348 = dma.vmem_to_hbm [thread:$0]  %s344, 128, %s346, [#allocation3]
    $region29: #{tpu_custom_call.1} parent=1 // pred_fallthru
      _
    // Predicated region
    $region30: #{tpu_custom_call.1} parent=1 // pred_check
      _
    $region31: #{tpu_custom_call.1} parent=1 // pred_check_branch
      %350 = sbr.rel (0) target = $region33
    $region32: #{tpu_custom_call.1} parent=1 // pred_region
      %352 = dma.done [#allocation3], 128
    $region33: #{tpu_custom_call.1} parent=1 // pred_fallthru
      _
    %353 = vsyncpa [#allocation3], 1

</llo_original>
